<compile_context>
chip_gen: v5e
topology: v5e:2x2
jax: 0.10.0
libtpu: 0.0.40
codegen_flags: <defaults>
</compile_context>

<pallas_src>
import functools

import jax
import jax.numpy as jnp
from jax.experimental import pallas as pl
from jax.experimental.pallas import tpu as pltpu


def _round_up(x, m):
    return ((x + m - 1) // m) * m


def _pop_encoder_kernel(obs_ref, rep_ref, prm_ref, exp_ref, out_ref, *, exact_f32):
    """Compute one (TB, TN*T) lane-dense slab of the flattened output.

    obs_ref : (TB, OD)     raw observations (OD = obs_dim rounded up to mult of 8)
    rep_ref : (OD, TN)     bf16 one-hot pop_dim replication: R[d, n] = (n//pop_dim == d)
    prm_ref : (2,  TN)     row 0 = mean, row 1 = -0.5/std**2 (divide hoisted)
    exp_ref : (TN, TN*T)   bf16 one-hot time expansion: E[n, n*T + t] = 1
    out_ref : (TB, TN*T)   slab of the row-major (B, N, T) output
    """
    x = obs_ref[...]                                   # (TB, OD) f32
    r = rep_ref[...]                                   # (OD, TN) bf16 one-hot

    # Exact f32 "selection" through the bf16 MXU: 3-way split of obs.  R is a
    # one-hot {0,1} matrix (exact in bf16), so summing the per-part matmuls
    # reconstructs the f32 obs value to ~1 ulp.  K = OD is tiny -> negligible.
    x0 = x.astype(jnp.bfloat16)
    res1 = x - x0.astype(jnp.float32)
    x1 = res1.astype(jnp.bfloat16)
    x2 = (res1 - x1.astype(jnp.float32)).astype(jnp.bfloat16)
    obs_rep = (jnp.dot(x0, r, preferred_element_type=jnp.float32)
               + jnp.dot(x1, r, preferred_element_type=jnp.float32)
               + jnp.dot(x2, r, preferred_element_type=jnp.float32))     # (TB, TN)

    mean = prm_ref[0:1, :]                             # (1, TN)
    scale = prm_ref[1:2, :]                            # (1, TN) = -0.5/std^2
    diff = obs_rep - mean
    pop_act = jnp.exp(diff * diff * scale)             # (TB, TN)  VPU + EUP

    e = exp_ref[...]                                   # (TN, TN*T) bf16 one-hot
    if exact_f32:
        # 2-way split: two native bf16 MXU passes (vs 6 for Precision.HIGHEST),
        # abs error <= ~4e-6 since pop_act is in (0, 1] -> kernel stays
        # HBM-store-bound on every TPU generation.
        hi = pop_act.astype(jnp.bfloat16)
        lo = (pop_act - hi.astype(jnp.float32)).astype(jnp.bfloat16)
        out = (jnp.dot(hi, e, preferred_element_type=jnp.float32)
               + jnp.dot(lo, e, preferred_element_type=jnp.float32))
    else:
        # bf16 output: a single native MXU pass is already below bf16 rounding.
        out = jnp.dot(pop_act.astype(jnp.bfloat16), e,
                      preferred_element_type=jnp.float32)
    out_ref[...] = out.astype(out_ref.dtype)


def pop_spike_encoder_none_spike(obs, mean, std, spike_ts, *,
                                 batch_tile=1024, out_dtype=jnp.float32):
    """obs: (B, obs_dim); mean, std: (1, obs_dim, pop_dim).

    Returns pop_spikes: (B, obs_dim*pop_dim, spike_ts), matching the PyTorch
    PopSpikeEncoderNoneSpike.forward (every timestep holds the same Gaussian
    population activation).  out_dtype=jnp.bfloat16 halves HBM store traffic
    (~2x wall-clock) if the downstream SNN tolerates it; default keeps f32.
    """
    B, obs_dim = obs.shape
    assert mean.shape[1] == obs_dim and std.shape == mean.shape
    pop_dim = mean.shape[-1]
    N = obs_dim * pop_dim
    T = int(spike_ts)
    out_size = jnp.dtype(out_dtype).itemsize

    # ---- tiling -------------------------------------------------------------
    # Neuron lane tile: 128 keeps every non-trailing output block a full
    # multiple of 128 lanes (unmasked vst) and bounds the expansion matrix at
    # O(128^2 * T).  For N < 128 use the single full-N tile (legal full-dim
    # blocks; problem is tiny anyway).
    TN = 128 if N >= 128 else N
    n_tiles = pl.cdiv(N, TN)
    N_blk = n_tiles * TN               # padded extent for the small side inputs

    # Batch tile: grow while the double-buffered output blocks stay <= 16 MiB
    # (actual out_dtype width), cap at 1024; then make sure v7x megacore gets
    # at least 2 batch tiles to shard.
    cap = max(8, min(int(batch_tile), 1024))
    TB = 8
    while TB < cap and TB < B and 2 * (2 * TB) * TN * T * out_size <= 16 * 2 ** 20:
        TB *= 2
    while TB > 8 and pl.cdiv(B, TB) < 2:
        TB //= 2
    n_btiles = pl.cdiv(B, TB)

    # ---- small, batch-independent side inputs (built once, tiny) -------------
    OD = _round_up(obs_dim, 8)         # sublane-aligned K for the replication dot
    obs_p = obs.astype(jnp.float32)
    if OD != obs_dim:
        obs_p = jnp.pad(obs_p, ((0, 0), (0, OD - obs_dim)))

    cols = jnp.arange(N_blk, dtype=jnp.int32)
    rep = ((cols[None, :] // pop_dim == jnp.arange(OD, dtype=jnp.int32)[:, None])
           & (cols[None, :] < N)).astype(jnp.bfloat16)            # (OD, N_blk)

    mean_flat = mean.reshape(1, N).astype(jnp.float32)
    scale_flat = (-0.5 / (std.astype(jnp.float32) ** 2)).reshape(1, N)
    params = jnp.concatenate([mean_flat, scale_flat], axis=0)     # (2, N)
    if N_blk != N:
        # padded neuron columns compute exp(0) = 1 and are masked on store.
        params = jnp.pad(params, ((0, 0), (0, N_blk - N)))

    ecols = jnp.arange(TN * T, dtype=jnp.int32)
    expand = (ecols[None, :] // T ==
              jnp.arange(TN, dtype=jnp.int32)[:, None]).astype(jnp.bfloat16)  # (TN, TN*T)

    kernel = functools.partial(_pop_encoder_kernel, exact_f32=(out_size >= 4))

    # Note: E's index_map is constant, so the pipeline only DMAs it once; its
    # bf16 footprint (<=512 KiB double-buffered) is negligible vs the output
    # blocks, so pipeline_mode=pl.Buffered(1) is not worth the extra knob here.
    out_wide = pl.pallas_call(
        kernel,
        out_shape=jax.ShapeDtypeStruct((B, N * T), out_dtype),
        grid=(n_btiles, n_tiles),
        in_specs=[
            pl.BlockSpec((TB, OD), lambda i, j: (i, 0)),          # obs
            pl.BlockSpec((OD, TN), lambda i, j: (0, j)),          # pop_dim replication R
            pl.BlockSpec((2, TN), lambda i, j: (0, j)),           # mean / scale
            pl.BlockSpec((TN, TN * T), lambda i, j: (0, 0)),      # time expansion E
        ],
        out_specs=pl.BlockSpec((TB, TN * T), lambda i, j: (i, j)),
        compiler_params=pltpu.CompilerParams(
            dimension_semantics=("parallel", "parallel"),
            vmem_limit_bytes=32 * 1024 * 1024,
        ),
    )(obs_p, rep, params, expand)

    # Row-major (B, N*T) == (B, N, T): metadata-only reshape.  No batch/neuron
    # pad-and-slice: partial trailing blocks were masked inside the kernel.
    return out_wide.reshape(B, N, T)


def init_encoder_params(obs_dim, pop_dim, mean_range, std):
    """Deterministic parameter init mirroring the PyTorch __init__."""
    mean = jnp.zeros((1, obs_dim, pop_dim), jnp.float32)
    if pop_dim > 1:
        delta_mean = (mean_range[1] - mean_range[0]) / (pop_dim - 1)
        centers = mean_range[0] + delta_mean * jnp.arange(pop_dim, dtype=jnp.float32)
        mean = jnp.broadcast_to(centers[None, None, :], (1, obs_dim, pop_dim))
    std_arr = jnp.full((1, obs_dim, pop_dim), std, jnp.float32)
    return mean, std_arr


def _reference(obs, mean, std, spike_ts):
    """Pure-JAX transcription of the PyTorch forward for verification."""
    B, obs_dim = obs.shape
    pop_dim = mean.shape[-1]
    obs3 = obs.reshape(B, obs_dim, 1)
    act = jnp.exp(-0.5 * (obs3 - mean) ** 2 / std ** 2).reshape(B, obs_dim * pop_dim)
    return jnp.broadcast_to(act[:, :, None], (B, obs_dim * pop_dim, spike_ts))


if __name__ == "__main__":
    key = jax.random.PRNGKey(0)
    k1, k2, k3 = jax.random.split(key, 3)

    # --- config 1: tiny N (< 128), partial batch block (B=2 < TB=8) ----------
    b1, od1, pd1, ts1 = 2, 4, 8, 8
    obs1 = jax.random.normal(k1, (b1, od1), dtype=jnp.float32)
    mean1, std1 = init_encoder_params(od1, pd1, (-3.0, 3.0), 0.15)
    out1 = jax.block_until_ready(pop_spike_encoder_none_spike(obs1, mean1, std1, ts1))
    ref1 = _reference(obs1, mean1, std1, ts1)
    assert out1.shape == (b1, od1 * pd1, ts1) and out1.dtype == jnp.float32
    assert jnp.allclose(out1, ref1, atol=1e-5, rtol=1e-5)

    # --- config 2: multi-tile grid on both axes (N=256 -> 2 neuron tiles) ----
    b2, od2, pd2, ts2 = 24, 16, 16, 8
    obs2 = jax.random.normal(k2, (b2, od2), dtype=jnp.float32)
    mean2, std2 = init_encoder_params(od2, pd2, (-3.0, 3.0), 0.5)
    out2 = jax.block_until_ready(
        pop_spike_encoder_none_spike(obs2, mean2, std2, ts2, batch_tile=8))
    ref2 = _reference(obs2, mean2, std2, ts2)
    assert out2.shape == (b2, od2 * pd2, ts2)
    assert jnp.allclose(out2, ref2, atol=1e-5, rtol=1e-5)

    # --- config 2b: bf16 output fast path (single-pass MXU expansion) --------
    out2b = jax.block_until_ready(pop_spike_encoder_none_spike(
        obs2, mean2, std2, ts2, batch_tile=8, out_dtype=jnp.bfloat16))
    assert out2b.dtype == jnp.bfloat16
    assert jnp.allclose(out2b.astype(jnp.float32), ref2, atol=4e-3, rtol=4e-3)

    # --- config 3: ragged shapes — obs_dim % 8 != 0, N % 128 != 0, B % 8 != 0
    b3, od3, pd3, ts3 = 5, 20, 10, 5
    obs3 = jax.random.normal(k3, (b3, od3), dtype=jnp.float32)
    mean3, std3 = init_encoder_params(od3, pd3, (-2.0, 2.0), 0.25)
    out3 = jax.block_until_ready(pop_spike_encoder_none_spike(obs3, mean3, std3, ts3))
    ref3 = _reference(obs3, mean3, std3, ts3)
    assert out3.shape == (b3, od3 * pd3, ts3)
    assert jnp.allclose(out3, ref3, atol=1e-5, rtol=1e-5)

    print("KERNEL_OK")
</pallas_src>

<mosaic_0001>
module attributes {stable_mosaic.version = 11 : i64} {
  func.func @_pop_encoder_kernel(%arg0: i32, %arg1: i32, %arg2: memref<8x8xf32, #tpu.memory_space<vmem>>, %arg3: memref<8x32xbf16, #tpu.memory_space<vmem>>, %arg4: memref<2x32xf32, #tpu.memory_space<vmem>>, %arg5: memref<32x256xbf16, #tpu.memory_space<vmem>>, %arg6: memref<8x256xf32, #tpu.memory_space<vmem>>) attributes {dimension_semantics = [#tpu.dimension_semantics<parallel>, #tpu.dimension_semantics<parallel>], iteration_bounds = array<i64: 1, 1>, scalar_prefetch = 0 : i64, scratch_operands = 0 : i64, tpu.core_type = #tpu.core_type<tc>, window_params = [{transform_indices = @transform_0, window_bounds = array<i64: 8, 8>}, {transform_indices = @transform_1, window_bounds = array<i64: 8, 32>}, {transform_indices = @transform_2, window_bounds = array<i64: 2, 32>}, {pipeline_mode = #tpu.pipeline_mode<synchronous>, transform_indices = @transform_3, window_bounds = array<i64: 32, 256>}, {transform_indices = @transform_4, window_bounds = array<i64: 8, 256>}]} {
    %c0 = arith.constant 0 : index
    %c0_0 = arith.constant 0 : index
    %0 = vector.load %arg2[%c0, %c0_0] : memref<8x8xf32, #tpu.memory_space<vmem>>, vector<8x8xf32>
    %c0_1 = arith.constant 0 : index
    %c0_2 = arith.constant 0 : index
    %1 = vector.load %arg3[%c0_1, %c0_2] : memref<8x32xbf16, #tpu.memory_space<vmem>>, vector<8x32xbf16>
    %2 = arith.truncf %0 : vector<8x8xf32> to vector<8x8xbf16>
    %3 = arith.extf %2 : vector<8x8xbf16> to vector<8x8xf32>
    %4 = arith.subf %0, %3 : vector<8x8xf32>
    %5 = arith.truncf %4 : vector<8x8xf32> to vector<8x8xbf16>
    %6 = arith.extf %5 : vector<8x8xbf16> to vector<8x8xf32>
    %7 = arith.subf %4, %6 : vector<8x8xf32>
    %8 = arith.truncf %7 : vector<8x8xf32> to vector<8x8xbf16>
    %cst = arith.constant dense<0.000000e+00> : vector<8x32xf32>
    %9 = tpu.matmul %2, %1, %cst {dimension_numbers = #tpu.dot_dimension_numbers<[1], [0], [0], [1], [0, 0, 1, 1], [], []>} : vector<8x8xbf16>, vector<8x32xbf16>, vector<8x32xf32> -> vector<8x32xf32>
    %cst_3 = arith.constant dense<0.000000e+00> : vector<8x32xf32>
    %10 = tpu.matmul %5, %1, %cst_3 {dimension_numbers = #tpu.dot_dimension_numbers<[1], [0], [0], [1], [0, 0, 1, 1], [], []>} : vector<8x8xbf16>, vector<8x32xbf16>, vector<8x32xf32> -> vector<8x32xf32>
    %11 = arith.addf %9, %10 : vector<8x32xf32>
    %cst_4 = arith.constant dense<0.000000e+00> : vector<8x32xf32>
    %12 = tpu.matmul %8, %1, %cst_4 {dimension_numbers = #tpu.dot_dimension_numbers<[1], [0], [0], [1], [0, 0, 1, 1], [], []>} : vector<8x8xbf16>, vector<8x32xbf16>, vector<8x32xf32> -> vector<8x32xf32>
    %13 = arith.addf %11, %12 : vector<8x32xf32>
    %c0_5 = arith.constant 0 : index
    %c0_6 = arith.constant 0 : index
    %14 = vector.load %arg4[%c0_5, %c0_6] : memref<2x32xf32, #tpu.memory_space<vmem>>, vector<1x32xf32>
    %c1 = arith.constant 1 : index
    %c0_7 = arith.constant 0 : index
    %15 = vector.load %arg4[%c1, %c0_7] : memref<2x32xf32, #tpu.memory_space<vmem>>, vector<1x32xf32>
    %16 = vector.broadcast %14 : vector<1x32xf32> to vector<8x32xf32>
    %17 = arith.subf %13, %16 : vector<8x32xf32>
    %18 = arith.mulf %17, %17 : vector<8x32xf32>
    %19 = vector.broadcast %15 : vector<1x32xf32> to vector<8x32xf32>
    %20 = arith.mulf %18, %19 : vector<8x32xf32>
    %21 = math.exp %20 : vector<8x32xf32>
    %c0_8 = arith.constant 0 : index
    %c0_9 = arith.constant 0 : index
    %22 = vector.load %arg5[%c0_8, %c0_9] : memref<32x256xbf16, #tpu.memory_space<vmem>>, vector<32x256xbf16>
    %23 = arith.truncf %21 : vector<8x32xf32> to vector<8x32xbf16>
    %24 = arith.extf %23 : vector<8x32xbf16> to vector<8x32xf32>
    %25 = arith.subf %21, %24 : vector<8x32xf32>
    %26 = arith.truncf %25 : vector<8x32xf32> to vector<8x32xbf16>
    %cst_10 = arith.constant dense<0.000000e+00> : vector<8x256xf32>
    %27 = tpu.matmul %23, %22, %cst_10 {dimension_numbers = #tpu.dot_dimension_numbers<[1], [0], [0], [1], [0, 0, 1, 1], [], []>} : vector<8x32xbf16>, vector<32x256xbf16>, vector<8x256xf32> -> vector<8x256xf32>
    %cst_11 = arith.constant dense<0.000000e+00> : vector<8x256xf32>
    %28 = tpu.matmul %26, %22, %cst_11 {dimension_numbers = #tpu.dot_dimension_numbers<[1], [0], [0], [1], [0, 0, 1, 1], [], []>} : vector<8x32xbf16>, vector<32x256xbf16>, vector<8x256xf32> -> vector<8x256xf32>
    %29 = arith.addf %27, %28 : vector<8x256xf32>
    %c0_12 = arith.constant 0 : index
    %c0_13 = arith.constant 0 : index
    %30 = vector.load %arg6[%c0_12, %c0_13] : memref<8x256xf32, #tpu.memory_space<vmem>>, vector<8x256xf32>
    tpu.vector_store %arg6[%c0_12, %c0_13], %29 {strides = array<i32>} : memref<8x256xf32, #tpu.memory_space<vmem>>, vector<8x256xf32>,
    return
  }
  func.func @transform_0(%arg0: i32, %arg1: i32) -> (i32, i32) {
    %c0_i32 = arith.constant 0 : i32
    %c0_i32_0 = arith.constant 0 : i32
    return %arg0, %c0_i32 : i32, i32
  }
  func.func @transform_1(%arg0: i32, %arg1: i32) -> (i32, i32) {
    %c0_i32 = arith.constant 0 : i32
    %c0_i32_0 = arith.constant 0 : i32
    return %c0_i32, %arg1 : i32, i32
  }
  func.func @transform_2(%arg0: i32, %arg1: i32) -> (i32, i32) {
    %c0_i32 = arith.constant 0 : i32
    %c0_i32_0 = arith.constant 0 : i32
    return %c0_i32, %arg1 : i32, i32
  }
  func.func @transform_3(%arg0: i32, %arg1: i32) -> (i32, i32) {
    %c0_i32 = arith.constant 0 : i32
    %c0_i32_0 = arith.constant 0 : i32
    %c0_i32_1 = arith.constant 0 : i32
    return %c0_i32, %c0_i32_0 : i32, i32
  }
  func.func @transform_4(%arg0: i32, %arg1: i32) -> (i32, i32) {
    %c0_i32 = arith.constant 0 : i32
    return %arg0, %arg1 : i32, i32
  }
}

</mosaic_0001>

<llo_original>
// kernel: tpu_custom_call.1
$region0: #{tpu_custom_call.1}
  #allocation0 [shape = 'u32[]', space=smem, size = 0x4, offset = 0x4, fixed_abs, tag = 'smem constant byte address 0x4 - core index']
  #allocation1 [shape = 'u32[72,128]{1,0:T(1,128)}', space=vmem, size = 0x9000, scoped, tag = 'internal scratch']
  %s0 = inlined_call_operand.hbm [shape: f32[2,8], index: 0, kind: input, shape index: {}]
  %s1 = inlined_call_operand.hbm [shape: bf16[8,32], index: 1, kind: input, shape index: {}]
  %s2 = inlined_call_operand.hbm [shape: f32[2,32], index: 2, kind: input, shape index: {}]
  %s3 = inlined_call_operand.hbm [shape: bf16[32,256], index: 3, kind: input, shape index: {}]
  %s4 = inlined_call_operand.hbm [shape: f32[2,256], index: 4, kind: output, shape index: {}]
  %s5 = sld [smem:[#allocation0]]
  $region42: #{tpu_custom_call.1} parent=0
    _
  %s7 = ssub.s32 1, %s5
  %s8 = scalar_select 0, %s7, %s5
  $region1: #{tpu_custom_call.1} parent=0
    #allocation2 [shape = 'u8[4096]{0}', space=vmem, size = 0x1000, scoped, tag = 'input window, operand 0, single buffered']
    #allocation3 [shape = 's32[1]{0}', space=sflag, size = 0x4, scoped, tag = 'scoped memory for tpu_custom_call.1']
    #allocation4 [shape = 's32[1]{0}', space=sflag, size = 0x4, scoped, tag = 'scoped memory for tpu_custom_call.1']
    #allocation5 [shape = 'u8[2048]{0}', space=vmem, size = 0x800, scoped, tag = 'input window, operand 1, single buffered']
    #allocation6 [shape = 's32[1]{0}', space=sflag, size = 0x4, scoped, tag = 'scoped memory for tpu_custom_call.1']
    #allocation7 [shape = 'u8[1024]{0}', space=vmem, size = 0x400, scoped, tag = 'input window, operand 2, single buffered']
    #allocation8 [shape = 'u8[16384]{0}', space=vmem, size = 0x4000, scoped, tag = 'input window, operand 3, single buffered']
    #allocation9 [shape = 's32[1]{0}', space=sflag, size = 0x4, scoped, tag = 'scoped memory for tpu_custom_call.1']
    #allocation10 [shape = 'u8[8192]{0}', space=vmem, size = 0x2000, scoped, tag = 'output window, operand 0, single buffered']
    %9 = vsyncpa [#allocation3], 0
    %10 = vsyncpa [#allocation6], 0
    %11 = vsyncpa [#allocation9], 0
    %12 = vsyncpa [#allocation4], 0
    // Predicated region
    $region2: #{tpu_custom_call.1} parent=1 // pred_check
      _
    $region3: #{tpu_custom_call.1} parent=1 // pred_check_branch
      %14 = sbr.rel (0) target = $region5
    $region4: #{tpu_custom_call.1} parent=1 // pred_region
      %16 = vsyncadd [#allocation3], 96
      %s17 = sshll.u32 %s0, 4
      %s18 = int_to_ptr.hbm [resolvable:$true] %s17
      %s19 = sshll.u32 [#allocation2], 4
      %s20 = int_to_ptr.vmem [resolvable:$true] %s19
      %25 = dma.hbm_to_vmem [thread:$0]  %s18, 32, %s20, [#allocation3], 32, 32, 2
    $region5: #{tpu_custom_call.1} parent=1 // pred_fallthru
      _
    // Predicated region
    $region6: #{tpu_custom_call.1} parent=1 // pred_check
      _
    $region7: #{tpu_custom_call.1} parent=1 // pred_check_branch
      %27 = sbr.rel (0) target = $region9
    $region8: #{tpu_custom_call.1} parent=1 // pred_region
      %29 = vsyncadd [#allocation6], 0
      %s31 = sshll.u32 %s1, 4
      %s32 = int_to_ptr.hbm [resolvable:$true] %s31
      %s33 = sshll.u32 [#allocation5], 4
      %s34 = int_to_ptr.vmem [resolvable:$true] %s33
      %36 = dma.hbm_to_vmem [thread:$0]  %s32, 64, %s34, [#allocation6]
    $region9: #{tpu_custom_call.1} parent=1 // pred_fallthru
      _
    // Predicated region
    $region10: #{tpu_custom_call.1} parent=1 // pred_check
      _
    $region11: #{tpu_custom_call.1} parent=1 // pred_check_branch
      %38 = sbr.rel (0) target = $region13
    $region12: #{tpu_custom_call.1} parent=1 // pred_region
      %40 = vsyncadd [#allocation6], 0
      %s42 = sshll.u32 %s2, 4
      %s43 = int_to_ptr.hbm [resolvable:$true] %s42
      %s44 = sshll.u32 [#allocation7], 4
      %s45 = int_to_ptr.vmem [resolvable:$true] %s44
      %47 = dma.hbm_to_vmem [thread:$0]  %s43, 32, %s45, [#allocation6]
    $region13: #{tpu_custom_call.1} parent=1 // pred_fallthru
      _
    // Predicated region
    $region14: #{tpu_custom_call.1} parent=1 // pred_check
      _
    $region15: #{tpu_custom_call.1} parent=1 // pred_check_branch
      %49 = sbr.rel (0) target = $region17
    $region16: #{tpu_custom_call.1} parent=1 // pred_region
      %51 = vsyncadd [#allocation9], 0
      %s52 = sshll.u32 %s3, 4
      %s53 = int_to_ptr.hbm [resolvable:$true] %s52
      %s54 = sshll.u32 [#allocation8], 4
      %s55 = int_to_ptr.vmem [resolvable:$true] %s54
      %60 = dma.hbm_to_vmem [thread:$0]  %s53, 512, %s55, [#allocation9], 128, 128, 8
    $region17: #{tpu_custom_call.1} parent=1 // pred_fallthru
      _
    // Predicated region
    $region18: #{tpu_custom_call.1} parent=1 // pred_check
      _
    $region19: #{tpu_custom_call.1} parent=1 // pred_check_branch
      %62 = sbr.rel (0) target = $region21
    $region20: #{tpu_custom_call.1} parent=1 // pred_region
      %64 = dma.done [#allocation3], 128
    $region21: #{tpu_custom_call.1} parent=1 // pred_fallthru
      _
    // Predicated region
    $region22: #{tpu_custom_call.1} parent=1 // pred_check
      _
    $region23: #{tpu_custom_call.1} parent=1 // pred_check_branch
      %66 = sbr.rel (0) target = $region25
    $region24: #{tpu_custom_call.1} parent=1 // pred_region
      %68 = dma.done [#allocation6], 64
    $region25: #{tpu_custom_call.1} parent=1 // pred_fallthru
      _
    // Predicated region
    $region26: #{tpu_custom_call.1} parent=1 // pred_check
      _
    $region27: #{tpu_custom_call.1} parent=1 // pred_check_branch
      %70 = sbr.rel (0) target = $region29
    $region28: #{tpu_custom_call.1} parent=1 // pred_region
      %72 = dma.done [#allocation6], 32
    $region29: #{tpu_custom_call.1} parent=1 // pred_fallthru
      _
    // Predicated region
    $region30: #{tpu_custom_call.1} parent=1 // pred_check
      _
    $region31: #{tpu_custom_call.1} parent=1 // pred_check_branch
      %74 = sbr.rel (0) target = $region33
    $region32: #{tpu_custom_call.1} parent=1 // pred_region
      %76 = dma.done [#allocation9], 512
    $region33: #{tpu_custom_call.1} parent=1 // pred_fallthru
      _
    %v78 = vld [vmem:[#allocation2] sm:$0xff]
    %v79 = vld [vmem:[#allocation5] sm:$0xf]
    %v80 = vpack.c.bf16 %v78, %v78
    %v81 = vunpack.c.l.bf16 %v80
    %v82 = vsub.f32 %v78, %v81
    %v83 = vpack.c.bf16 %v82, %v82
    %v84 = vunpack.c.l.bf16 %v83
    %v85 = vsub.f32 %v82, %v84
    %v86 = vpack.c.bf16 %v85, %v85
    %vm87 = vcmask 64512
    %v89 = vsel %vm87, %v83, 0
    %vm91 = vcmask 1043456
    %v93 = vsel %vm91, %v79, 0
    %95 = vmatpush.bf16.msra.mxu0 0
    %96 = vmatpush.bf16.msra.mxu0 0
    %97 = vmatpush.bf16.msra.mxu0 0
    %98 = vmatpush.bf16.msra.mxu0 0
    %99 = vmatpush.bf16.msra.mxu0 0
    %100 = vmatpush.bf16.msra.mxu0 0
    %101 = vmatpush.bf16.msra.mxu0 0
    %102 = vmatpush.bf16.msra.mxu0 %v93
    %103 = vmatmul.bf16.gmra.mxu0 %v89
    %v104 = vpop.f32.mrf.mxu0
    %v105 = vadd.f32 0.0, %v104
    %v106 = vpop.f32.mrf.mxu0
    %107 = vdwg.mxu0
    %v109 = vsel %vm87, %v80, 0
    %111 = vmatpush.bf16.msra.mxu0 0
    %112 = vmatpush.bf16.msra.mxu0 0
    %113 = vmatpush.bf16.msra.mxu0 0
    %114 = vmatpush.bf16.msra.mxu0 0
    %115 = vmatpush.bf16.msra.mxu0 0
    %116 = vmatpush.bf16.msra.mxu0 0
    %117 = vmatpush.bf16.msra.mxu0 0
    %118 = vmatpush.bf16.msra.mxu0 %v93
    %119 = vmatmul.bf16.gmra.mxu0 %v109
    %v120 = vpop.f32.mrf.mxu0
    %v121 = vadd.f32 %v105, %v120
    %v122 = vpop.f32.mrf.mxu0
    %123 = vdwg.mxu0
    %v125 = vsel %vm87, %v86, 0
    %127 = vmatpush.bf16.msra.mxu0 0
    %128 = vmatpush.bf16.msra.mxu0 0
    %129 = vmatpush.bf16.msra.mxu0 0
    %130 = vmatpush.bf16.msra.mxu0 0
    %131 = vmatpush.bf16.msra.mxu0 0
    %132 = vmatpush.bf16.msra.mxu0 0
    %133 = vmatpush.bf16.msra.mxu0 0
    %134 = vmatpush.bf16.msra.mxu0 %v93
    %135 = vmatmul.bf16.gmra.mxu0 %v125
    %v136 = vpop.f32.mrf.mxu0
    %v137 = vadd.f32 0.0, %v136
    %v138 = vpop.f32.mrf.mxu0
    %139 = vdwg.mxu0
    %v140 = vadd.f32 %v121, %v137
    %v141 = vld [vmem:[#allocation7] sm:$0x1]
    %v142 = vld [vmem:[#allocation7 + $0x1] sm:$0x1]
    %v143 = vperm.slane %v141, 0
    %v144 = vsub.f32 %v140, %v143
    %v145 = vmul.f32 %v144, %v144
    %v146 = vperm.slane %v142, 0
    %v147 = vmul.f32 %v145, %v146
    %v148 = vmul.f32 %v147, 1.442695
    %v149 = vpow.pop %v148
    %v150 = vld [vmem:[#allocation8] sm:$0xff]
    %v151 = vld [vmem:[#allocation8 + $0x8] sm:$0xff]
    %v152 = vld [vmem:[#allocation8 + $0x10] sm:$0xff]
    %v153 = vld [vmem:[#allocation8 + $0x18] sm:$0xff]
    %v154 = vpack.c.bf16 %v149, %v149
    %v155 = vunpack.c.l.bf16 %v154
    %v156 = vsub.f32 %v149, %v155
    %v157 = vpack.c.bf16 %v156, %v156
    %v162 = vunpack.c.l.b16 %v150
    %v163 = vunpack.c.h.b16 %v150
    %v164 = vunpack.c.l.b16 %v151
    %v165 = vunpack.c.h.b16 %v151
    %v166 = vunpack.c.l.b16 %v152
    %v167 = vunpack.c.h.b16 %v152
    %v168 = vunpack.c.l.b16 %v153
    %v169 = vunpack.c.h.b16 %v153
    %v170 = vpack.c.b16 %v164, %v162
    %v171 = vpack.c.b16 %v165, %v163
    %v172 = vpack.c.b16 %v168, %v166
    %v173 = vpack.c.b16 %v169, %v167
    %vm178 = vcmask 261120
    %v180 = vsel %vm178, %v157, 0
    %182 = vmatpush.bf16.msra.mxu0 0
    %183 = vmatpush.bf16.msra.mxu0 0
    %184 = vmatpush.bf16.msra.mxu0 0
    %185 = vmatpush.bf16.msra.mxu0 0
    %186 = vmatpush.bf16.msra.mxu0 0
    %187 = vmatpush.bf16.msra.mxu0 0
    %188 = vmatpush.bf16.msra.mxu0 %v172
    %189 = vmatpush.bf16.msra.mxu0 %v170
    %190 = vmatmul.bf16.gmra.mxu0 %v180
    %v191 = vpop.f32.mrf.mxu0
    %v192 = vadd.f32 0.0, %v191
    %v193 = vpop.f32.mrf.mxu0
    %194 = vdwg.mxu0
    %195 = vmatpush.bf16.msra.mxu0 0
    %196 = vmatpush.bf16.msra.mxu0 0
    %197 = vmatpush.bf16.msra.mxu0 0
    %198 = vmatpush.bf16.msra.mxu0 0
    %199 = vmatpush.bf16.msra.mxu0 0
    %200 = vmatpush.bf16.msra.mxu0 0
    %201 = vmatpush.bf16.msra.mxu0 %v173
    %202 = vmatpush.bf16.msra.mxu0 %v171
    %203 = vmatmul.bf16.gmra.mxu0 %v180
    %v204 = vpop.f32.mrf.mxu0
    %v205 = vadd.f32 0.0, %v204
    %v206 = vpop.f32.mrf.mxu0
    %207 = vdwg.mxu0
    %v209 = vsel %vm178, %v154, 0
    %211 = vmatpush.bf16.msra.mxu0 0
    %212 = vmatpush.bf16.msra.mxu0 0
    %213 = vmatpush.bf16.msra.mxu0 0
    %214 = vmatpush.bf16.msra.mxu0 0
    %215 = vmatpush.bf16.msra.mxu0 0
    %216 = vmatpush.bf16.msra.mxu0 0
    %217 = vmatpush.bf16.msra.mxu0 %v172
    %218 = vmatpush.bf16.msra.mxu0 %v170
    %219 = vmatmul.bf16.gmra.mxu0 %v209
    %v220 = vpop.f32.mrf.mxu0
    %v221 = vadd.f32 %v192, %v220
    %v222 = vpop.f32.mrf.mxu0
    %223 = vdwg.mxu0
    %224 = vmatpush.bf16.msra.mxu0 0
    %225 = vmatpush.bf16.msra.mxu0 0
    %226 = vmatpush.bf16.msra.mxu0 0
    %227 = vmatpush.bf16.msra.mxu0 0
    %228 = vmatpush.bf16.msra.mxu0 0
    %229 = vmatpush.bf16.msra.mxu0 0
    %230 = vmatpush.bf16.msra.mxu0 %v173
    %231 = vmatpush.bf16.msra.mxu0 %v171
    %232 = vmatmul.bf16.gmra.mxu0 %v209
    %v233 = vpop.f32.mrf.mxu0
    %v234 = vadd.f32 %v205, %v233
    %v235 = vpop.f32.mrf.mxu0
    %236 = vdwg.mxu0
    %v239 = vrot.slane %v234, 6
    %vm240 = vcmask 1041408
    %v241 = vsel %vm240, %v221, %v239
    %vm242 = vcmask 1043458
    %v243 = vsel %vm242, %v221, %v239
    %v244 = vrot.slane %v243, 2
    %vm245 = vcmask 1045508
    %v246 = vsel %vm245, %v221, %v239
    %v247 = vrot.slane %v246, 4
    %vm248 = vcmask 1045504
    %v249 = vsel %vm248, %v239, %v221
    %v250 = vrot.slane %v249, 6
    %255 = vst [vmem:[#allocation10] sm:$0xf] %v241
    %256 = vst [vmem:[#allocation10 + $0x4] sm:$0xf] %v244
    %257 = vst [vmem:[#allocation10 + $0x8] sm:$0xf] %v247
    %258 = vst [vmem:[#allocation10 + $0xc] sm:$0xf] %v250
    // Predicated region
    $region34: #{tpu_custom_call.1} parent=1 // pred_check
      _
    $region35: #{tpu_custom_call.1} parent=1 // pred_check_branch
      %260 = sbr.rel (0) target = $region37
    $region36: #{tpu_custom_call.1} parent=1 // pred_region
      %262 = vsyncadd [#allocation4], 192
      %s263 = sshll.u32 [#allocation10], 4
      %s264 = int_to_ptr.vmem [resolvable:$true] %s263
      %s265 = sshll.u32 %s4, 4
      %s266 = int_to_ptr.hbm [resolvable:$true] %s265
      %271 = dma.vmem_to_hbm [thread:$0]  %s264, 64, %s266, [#allocation4], 64, 64, 4
    $region37: #{tpu_custom_call.1} parent=1 // pred_fallthru
      _
    // Predicated region
    $region38: #{tpu_custom_call.1} parent=1 // pred_check
      _
    $region39: #{tpu_custom_call.1} parent=1 // pred_check_branch
      %273 = sbr.rel (0) target = $region41
    $region40: #{tpu_custom_call.1} parent=1 // pred_region
      %275 = dma.done [#allocation4], 256
    $region41: #{tpu_custom_call.1} parent=1 // pred_fallthru
      _
    %276 = vsyncpa [#allocation3], 1
    %277 = vsyncpa [#allocation6], 1
    %278 = vsyncpa [#allocation9], 1
    %279 = vsyncpa [#allocation4], 1

</llo_original>
